<compile_context>
chip_gen: v5e
topology: v5e:2x2
jax: 0.10.0
libtpu: 0.0.40
codegen_flags: <defaults>
</compile_context>

<pallas_src>
import math
import functools

import jax
import jax.numpy as jnp
import numpy as np
from jax.experimental import pallas as pl
from jax.experimental.pallas import tpu as pltpu  # noqa: F401  (kept for TPU backend)

# ---------------- problem sizes (small, forward-consistent) ----------------
B, Dx, H, Dz, L = 8, 32, 32, 8, 2


# ---------------- fused Pallas kernel ----------------
def vae_fused_kernel(x_ref, eps_ref,
                     ew1_ref, eb1_ref, ewh_ref, ebh_ref,
                     dw1_ref, db1_ref, dwh_ref, dbh_ref,
                     z_out_ref, x_out_ref, *, L, Dz):
    # ---- encoder: hidden layer + concatenated (mu | logvar) head ----
    h = jnp.tanh(
        jnp.dot(x_ref[...], ew1_ref[...], preferred_element_type=jnp.float32)
        + eb1_ref[...])
    z = (jnp.dot(h, ewh_ref[...], preferred_element_type=jnp.float32)
         + ebh_ref[...])                              # (B, 2*Dz) = [z_mean | z_logvar]
    z_out_ref[...] = z

    # ---- reparameterization, L folded into the row dimension ----
    z_mean = z[:, :Dz]                                # (B, Dz)
    z_std = jnp.exp(0.5 * z[:, Dz:])                  # (B, Dz)
    z_mean_rep = jnp.concatenate([z_mean] * L, axis=0)   # (L*B, Dz)
    z_std_rep = jnp.concatenate([z_std] * L, axis=0)     # (L*B, Dz)
    z_l = z_mean_rep + z_std_rep * eps_ref[...]          # (L*B, Dz)

    # ---- decoder: hidden layer + concatenated (mu | logvar) head ----
    hd = jnp.tanh(
        jnp.dot(z_l, dw1_ref[...], preferred_element_type=jnp.float32)
        + db1_ref[...])
    x_out_ref[...] = (jnp.dot(hd, dwh_ref[...], preferred_element_type=jnp.float32)
                      + dbh_ref[...])                 # (L*B, 2*Dx) = [x_mean | x_logvar]


# ---------------- wrapper ----------------
def gaussian_vae_forward(x, enc_params, dec_params, eps):
    """Matches GaussianVAE.forward: returns (z_mean, z_logvar, x_mean, x_logvar)."""
    ew1, eb1, ewm, ebm, ewv, ebv = enc_params
    dw1, db1, dwm, dbm, dwv, dbv = dec_params

    b, dx = x.shape
    l, _, dz = eps.shape

    # Concatenate the mu/logvar heads once in the wrapper (cheap XLA concat):
    # one matmul per head pair, lane-denser kernel outputs.
    ewh = jnp.concatenate([ewm, ewv], axis=1)   # (H, 2*Dz)
    ebh = jnp.concatenate([ebm, ebv], axis=1)   # (1, 2*Dz)
    dwh = jnp.concatenate([dwm, dwv], axis=1)   # (H, 2*Dx)
    dbh = jnp.concatenate([dbm, dbv], axis=1)   # (1, 2*Dx)

    # Fold the Monte-Carlo axis into rows.
    eps2d = eps.reshape(l * b, dz)

    z_out, x_out = pl.pallas_call(
        functools.partial(vae_fused_kernel, L=l, Dz=dz),
        # single grid point, whole-array VMEM blocks (no in/out specs needed)
        out_shape=(jax.ShapeDtypeStruct((b, 2 * dz), jnp.float32),
                   jax.ShapeDtypeStruct((l * b, 2 * dx), jnp.float32)),
    )(x, eps2d, ew1, eb1, ewh, ebh, dw1, db1, dwh, dbh)

    # Split the concatenated slabs outside the kernel (layout plumbing only).
    z_mean = z_out[:, :dz]
    z_logvar = z_out[:, dz:]
    x_cat = x_out.reshape(l, b, 2 * dx)
    x_mean = x_cat[..., :dx]
    x_logvar = x_cat[..., dx:]
    return z_mean, z_logvar, x_mean, x_logvar


# ---------------- pure-JAX reference (for correctness check) ----------------
def _ref_forward(x, enc_params, dec_params, eps):
    w1, b1, wm, bm, wv, bv = enc_params
    h = jnp.tanh(x @ w1 + b1)
    z_mean = h @ wm + bm
    z_logvar = h @ wv + bv
    z_l = z_mean[None] + jnp.exp(0.5 * z_logvar)[None] * eps
    dw1, db1, dwm, dbm, dwv, dbv = dec_params
    hd = jnp.tanh(z_l @ dw1 + db1)
    x_mean = hd @ dwm + dbm
    x_logvar = hd @ dwv + dbv
    return z_mean, z_logvar, x_mean, x_logvar


# ---------------- deterministic parameter init ----------------
def _init_params(key, in_dim, hid, out_dim):
    k = jax.random.split(key, 6)
    s1 = 1.0 / math.sqrt(in_dim)
    s2 = 1.0 / math.sqrt(hid)
    w1 = jax.random.normal(k[0], (in_dim, hid), jnp.float32) * s1
    b1 = jax.random.normal(k[1], (1, hid), jnp.float32) * 0.01
    wm = jax.random.normal(k[2], (hid, out_dim), jnp.float32) * s2
    bm = jax.random.normal(k[3], (1, out_dim), jnp.float32) * 0.01
    wv = jax.random.normal(k[4], (hid, out_dim), jnp.float32) * s2
    bv = jax.random.normal(k[5], (1, out_dim), jnp.float32) * 0.01
    return (w1, b1, wm, bm, wv, bv)


if __name__ == "__main__":
    root = jax.random.PRNGKey(0)
    k_enc, k_dec, k_x, k_eps = jax.random.split(root, 4)

    enc_params = _init_params(k_enc, Dx, H, Dz)
    dec_params = _init_params(k_dec, Dz, H, Dx)

    x = jax.random.normal(k_x, (B, Dx), jnp.float32)
    # torch.randn(self.L, *z_mean.size()) equivalent, drawn deterministically here.
    # TODO(synk): eps kept as a host-generated input for bitwise reproducibility;
    # could be generated in-kernel with pltpu.prng_seed/stateful_normal instead.
    eps = jax.random.normal(k_eps, (L, B, Dz), jnp.float32)

    out = gaussian_vae_forward(x, enc_params, dec_params, eps)
    out = jax.block_until_ready(out)

    ref = _ref_forward(x, enc_params, dec_params, eps)
    for got, want in zip(out, ref):
        np.testing.assert_allclose(np.asarray(got), np.asarray(want),
                                   rtol=1e-4, atol=1e-4)

    print("KERNEL_OK")
</pallas_src>

<mosaic_0001>
module attributes {stable_mosaic.version = 11 : i64} {
  func.func @vae_fused_kernel(%arg0: memref<8x32xf32, #tpu.memory_space<vmem>>, %arg1: memref<16x8xf32, #tpu.memory_space<vmem>>, %arg2: memref<32x32xf32, #tpu.memory_space<vmem>>, %arg3: memref<1x32xf32, #tpu.memory_space<vmem>>, %arg4: memref<32x16xf32, #tpu.memory_space<vmem>>, %arg5: memref<1x16xf32, #tpu.memory_space<vmem>>, %arg6: memref<8x32xf32, #tpu.memory_space<vmem>>, %arg7: memref<1x32xf32, #tpu.memory_space<vmem>>, %arg8: memref<32x64xf32, #tpu.memory_space<vmem>>, %arg9: memref<1x64xf32, #tpu.memory_space<vmem>>, %arg10: memref<8x16xf32, #tpu.memory_space<vmem>>, %arg11: memref<16x64xf32, #tpu.memory_space<vmem>>) attributes {dimension_semantics = [], scalar_prefetch = 0 : i64, scratch_operands = 0 : i64, tpu.core_type = #tpu.core_type<tc>} {
    %c0 = arith.constant 0 : index
    %c0_0 = arith.constant 0 : index
    %0 = vector.load %arg0[%c0, %c0_0] : memref<8x32xf32, #tpu.memory_space<vmem>>, vector<8x32xf32>
    %c0_1 = arith.constant 0 : index
    %c0_2 = arith.constant 0 : index
    %1 = vector.load %arg2[%c0_1, %c0_2] : memref<32x32xf32, #tpu.memory_space<vmem>>, vector<32x32xf32>
    %cst = arith.constant dense<0.000000e+00> : vector<8x32xf32>
    %2 = tpu.matmul %0, %1, %cst {dimension_numbers = #tpu.dot_dimension_numbers<[1], [0], [0], [1], [0, 0, 1, 1], [], []>} : vector<8x32xf32>, vector<32x32xf32>, vector<8x32xf32> -> vector<8x32xf32>
    %c0_3 = arith.constant 0 : index
    %c0_4 = arith.constant 0 : index
    %3 = vector.load %arg3[%c0_3, %c0_4] : memref<1x32xf32, #tpu.memory_space<vmem>>, vector<1x32xf32>
    %4 = vector.broadcast %3 : vector<1x32xf32> to vector<8x32xf32>
    %5 = arith.addf %2, %4 : vector<8x32xf32>
    %6 = math.tanh %5 : vector<8x32xf32>
    %c0_5 = arith.constant 0 : index
    %c0_6 = arith.constant 0 : index
    %7 = vector.load %arg4[%c0_5, %c0_6] : memref<32x16xf32, #tpu.memory_space<vmem>>, vector<32x16xf32>
    %cst_7 = arith.constant dense<0.000000e+00> : vector<8x16xf32>
    %8 = tpu.matmul %6, %7, %cst_7 {dimension_numbers = #tpu.dot_dimension_numbers<[1], [0], [0], [1], [0, 0, 1, 1], [], []>} : vector<8x32xf32>, vector<32x16xf32>, vector<8x16xf32> -> vector<8x16xf32>
    %c0_8 = arith.constant 0 : index
    %c0_9 = arith.constant 0 : index
    %9 = vector.load %arg5[%c0_8, %c0_9] : memref<1x16xf32, #tpu.memory_space<vmem>>, vector<1x16xf32>
    %10 = vector.broadcast %9 : vector<1x16xf32> to vector<8x16xf32>
    %11 = arith.addf %8, %10 : vector<8x16xf32>
    %c0_10 = arith.constant 0 : index
    %c0_11 = arith.constant 0 : index
    %12 = vector.load %arg10[%c0_10, %c0_11] : memref<8x16xf32, #tpu.memory_space<vmem>>, vector<8x16xf32>
    tpu.vector_store %arg10[%c0_10, %c0_11], %11 {strides = array<i32>} : memref<8x16xf32, #tpu.memory_space<vmem>>, vector<8x16xf32>,
    %13 = vector.extract_strided_slice %11 {offsets = [0, 0], sizes = [8, 8], strides = [1, 1]} : vector<8x16xf32> to vector<8x8xf32>
    %14 = vector.extract_strided_slice %11 {offsets = [0, 8], sizes = [8, 8], strides = [1, 1]} : vector<8x16xf32> to vector<8x8xf32>
    %cst_12 = arith.constant 5.000000e-01 : f32
    %15 = vector.broadcast %cst_12 : f32 to vector<8x8xf32>
    %16 = arith.mulf %15, %14 : vector<8x8xf32>
    %17 = math.exp %16 : vector<8x8xf32>
    %18 = tpu.concatenate %13, %13 in 0 : vector<8x8xf32>, vector<8x8xf32> -> vector<16x8xf32>
    %19 = tpu.concatenate %17, %17 in 0 : vector<8x8xf32>, vector<8x8xf32> -> vector<16x8xf32>
    %c0_13 = arith.constant 0 : index
    %c0_14 = arith.constant 0 : index
    %20 = vector.load %arg1[%c0_13, %c0_14] : memref<16x8xf32, #tpu.memory_space<vmem>>, vector<16x8xf32>
    %21 = arith.mulf %19, %20 : vector<16x8xf32>
    %22 = arith.addf %18, %21 : vector<16x8xf32>
    %c0_15 = arith.constant 0 : index
    %c0_16 = arith.constant 0 : index
    %23 = vector.load %arg6[%c0_15, %c0_16] : memref<8x32xf32, #tpu.memory_space<vmem>>, vector<8x32xf32>
    %cst_17 = arith.constant dense<0.000000e+00> : vector<16x32xf32>
    %24 = tpu.matmul %22, %23, %cst_17 {dimension_numbers = #tpu.dot_dimension_numbers<[1], [0], [0], [1], [0, 0, 1, 1], [], []>} : vector<16x8xf32>, vector<8x32xf32>, vector<16x32xf32> -> vector<16x32xf32>
    %c0_18 = arith.constant 0 : index
    %c0_19 = arith.constant 0 : index
    %25 = vector.load %arg7[%c0_18, %c0_19] : memref<1x32xf32, #tpu.memory_space<vmem>>, vector<1x32xf32>
    %26 = vector.broadcast %25 : vector<1x32xf32> to vector<16x32xf32>
    %27 = arith.addf %24, %26 : vector<16x32xf32>
    %28 = math.tanh %27 : vector<16x32xf32>
    %c0_20 = arith.constant 0 : index
    %c0_21 = arith.constant 0 : index
    %29 = vector.load %arg8[%c0_20, %c0_21] : memref<32x64xf32, #tpu.memory_space<vmem>>, vector<32x64xf32>
    %cst_22 = arith.constant dense<0.000000e+00> : vector<16x64xf32>
    %30 = tpu.matmul %28, %29, %cst_22 {dimension_numbers = #tpu.dot_dimension_numbers<[1], [0], [0], [1], [0, 0, 1, 1], [], []>} : vector<16x32xf32>, vector<32x64xf32>, vector<16x64xf32> -> vector<16x64xf32>
    %c0_23 = arith.constant 0 : index
    %c0_24 = arith.constant 0 : index
    %31 = vector.load %arg9[%c0_23, %c0_24] : memref<1x64xf32, #tpu.memory_space<vmem>>, vector<1x64xf32>
    %32 = vector.broadcast %31 : vector<1x64xf32> to vector<16x64xf32>
    %33 = arith.addf %30, %32 : vector<16x64xf32>
    %c0_25 = arith.constant 0 : index
    %c0_26 = arith.constant 0 : index
    %34 = vector.load %arg11[%c0_25, %c0_26] : memref<16x64xf32, #tpu.memory_space<vmem>>, vector<16x64xf32>
    tpu.vector_store %arg11[%c0_25, %c0_26], %33 {strides = array<i32>} : memref<16x64xf32, #tpu.memory_space<vmem>>, vector<16x64xf32>,
    return
  }
}

</mosaic_0001>

<llo_original>
// kernel: tpu_custom_call.1
$region0: #{tpu_custom_call.1}
  #allocation0 [shape = 'u32[]', space=smem, size = 0x4, offset = 0x4, fixed_abs, tag = 'smem constant byte address 0x4 - core index']
  #allocation1 [shape = 'u32[72,128]{1,0:T(1,128)}', space=vmem, size = 0x9000, scoped, tag = 'internal scratch']
  %s0 = inlined_call_operand.vmem [shape: f32[8,32], index: 0, kind: input, shape index: {}]
  %s1 = inlined_call_operand.vmem [shape: f32[16,8], index: 1, kind: input, shape index: {}]
  %s2 = inlined_call_operand.vmem [shape: f32[32,32], index: 2, kind: input, shape index: {}]
  %s3 = inlined_call_operand.vmem [shape: f32[1,32], index: 3, kind: input, shape index: {}]
  %s4 = inlined_call_operand.vmem [shape: f32[32,16], index: 4, kind: input, shape index: {}]
  %s5 = inlined_call_operand.vmem [shape: f32[1,16], index: 5, kind: input, shape index: {}]
  %s6 = inlined_call_operand.vmem [shape: f32[8,32], index: 6, kind: input, shape index: {}]
  %s7 = inlined_call_operand.vmem [shape: f32[1,32], index: 7, kind: input, shape index: {}]
  %s8 = inlined_call_operand.hbm [shape: f32[32,64], index: 8, kind: input, shape index: {}]
  %s9 = inlined_call_operand.vmem [shape: f32[1,64], index: 9, kind: input, shape index: {}]
  %s10 = inlined_call_operand.hbm [shape: f32[8,16], index: 10, kind: output, shape index: {0}]
  %s11 = inlined_call_operand.hbm [shape: f32[16,64], index: 11, kind: output, shape index: {1}]
  %12 = xla_tuple %s10, %s11
  %s13 = sld [smem:[#allocation0]]
  $region62: #{tpu_custom_call.1} parent=0
    _
  %s15 = ssub.s32 1, %s13
  %s16 = scalar_select 0, %s15, %s13
  $region1: #{tpu_custom_call.1} parent=0
    #allocation2 [shape = 'u8[16384]{0}', space=vmem, size = 0x4000, scoped, tag = 'input window, operand 8, single buffered']
    #allocation3 [shape = 's32[1]{0}', space=sflag, size = 0x4, scoped, tag = 'scoped memory for tpu_custom_call.1']
    #allocation4 [shape = 's32[1]{0}', space=sflag, size = 0x4, scoped, tag = 'scoped memory for tpu_custom_call.1']
    #allocation5 [shape = 'u8[4096]{0}', space=vmem, size = 0x1000, scoped, tag = 'output window, operand 0, single buffered']
    #allocation6 [shape = 'u8[8192]{0}', space=vmem, size = 0x2000, scoped, tag = 'output window, operand 1, single buffered']
    #allocation7 [shape = 's32[1]{0}', space=sflag, size = 0x4, scoped, tag = 'scoped memory for tpu_custom_call.1']
    %17 = vsyncpa [#allocation3], 0
    %18 = vsyncpa [#allocation4], 0
    %19 = vsyncpa [#allocation7], 0
    // Predicated region
    $region2: #{tpu_custom_call.1} parent=1 // pred_check
      _
    $region3: #{tpu_custom_call.1} parent=1 // pred_check_branch
      %21 = sbr.rel (0) target = $region5
    $region4: #{tpu_custom_call.1} parent=1 // pred_region
      _
    $region5: #{tpu_custom_call.1} parent=1 // pred_fallthru
      _
    // Predicated region
    $region6: #{tpu_custom_call.1} parent=1 // pred_check
      _
    $region7: #{tpu_custom_call.1} parent=1 // pred_check_branch
      %23 = sbr.rel (0) target = $region9
    $region8: #{tpu_custom_call.1} parent=1 // pred_region
      _
    $region9: #{tpu_custom_call.1} parent=1 // pred_fallthru
      _
    // Predicated region
    $region10: #{tpu_custom_call.1} parent=1 // pred_check
      _
    $region11: #{tpu_custom_call.1} parent=1 // pred_check_branch
      %25 = sbr.rel (0) target = $region13
    $region12: #{tpu_custom_call.1} parent=1 // pred_region
      _
    $region13: #{tpu_custom_call.1} parent=1 // pred_fallthru
      _
    // Predicated region
    $region14: #{tpu_custom_call.1} parent=1 // pred_check
      _
    $region15: #{tpu_custom_call.1} parent=1 // pred_check_branch
      %27 = sbr.rel (0) target = $region17
    $region16: #{tpu_custom_call.1} parent=1 // pred_region
      _
    $region17: #{tpu_custom_call.1} parent=1 // pred_fallthru
      _
    // Predicated region
    $region18: #{tpu_custom_call.1} parent=1 // pred_check
      _
    $region19: #{tpu_custom_call.1} parent=1 // pred_check_branch
      %29 = sbr.rel (0) target = $region21
    $region20: #{tpu_custom_call.1} parent=1 // pred_region
      _
    $region21: #{tpu_custom_call.1} parent=1 // pred_fallthru
      _
    // Predicated region
    $region22: #{tpu_custom_call.1} parent=1 // pred_check
      _
    $region23: #{tpu_custom_call.1} parent=1 // pred_check_branch
      %31 = sbr.rel (0) target = $region25
    $region24: #{tpu_custom_call.1} parent=1 // pred_region
      _
    $region25: #{tpu_custom_call.1} parent=1 // pred_fallthru
      _
    // Predicated region
    $region26: #{tpu_custom_call.1} parent=1 // pred_check
      _
    $region27: #{tpu_custom_call.1} parent=1 // pred_check_branch
      %33 = sbr.rel (0) target = $region29
    $region28: #{tpu_custom_call.1} parent=1 // pred_region
      _
    $region29: #{tpu_custom_call.1} parent=1 // pred_fallthru
      _
    // Predicated region
    $region30: #{tpu_custom_call.1} parent=1 // pred_check
      _
    $region31: #{tpu_custom_call.1} parent=1 // pred_check_branch
      %35 = sbr.rel (0) target = $region33
    $region32: #{tpu_custom_call.1} parent=1 // pred_region
      _
    $region33: #{tpu_custom_call.1} parent=1 // pred_fallthru
      _
    // Predicated region
    $region34: #{tpu_custom_call.1} parent=1 // pred_check
      _
    $region35: #{tpu_custom_call.1} parent=1 // pred_check_branch
      %37 = sbr.rel (0) target = $region37
    $region36: #{tpu_custom_call.1} parent=1 // pred_region
      %39 = vsyncadd [#allocation3], 0
      %s40 = sshll.u32 %s8, 4
      %s41 = int_to_ptr.hbm [resolvable:$true] %s40
      %s42 = sshll.u32 [#allocation2], 4
      %s43 = int_to_ptr.vmem [resolvable:$true] %s42
      %48 = dma.hbm_to_vmem [thread:$0]  %s41, 512, %s43, [#allocation3], 128, 128, 8
    $region37: #{tpu_custom_call.1} parent=1 // pred_fallthru
      _
    // Predicated region
    $region38: #{tpu_custom_call.1} parent=1 // pred_check
      _
    $region39: #{tpu_custom_call.1} parent=1 // pred_check_branch
      %50 = sbr.rel (0) target = $region41
    $region40: #{tpu_custom_call.1} parent=1 // pred_region
      _
    $region41: #{tpu_custom_call.1} parent=1 // pred_fallthru
      _
    // Predicated region
    $region42: #{tpu_custom_call.1} parent=1 // pred_check
      _
    $region43: #{tpu_custom_call.1} parent=1 // pred_check_branch
      %52 = sbr.rel (0) target = $region45
    $region44: #{tpu_custom_call.1} parent=1 // pred_region
      %54 = dma.done [#allocation3], 512
    $region45: #{tpu_custom_call.1} parent=1 // pred_fallthru
      _
    %v55 = vld [vmem:[%s0] sm:$0xff]
    %v56 = vld [vmem:[%s2] sm:$0xff]
    %v57 = vld [vmem:[%s2 + $0x8] sm:$0xff]
    %v58 = vld [vmem:[%s2 + $0x10] sm:$0xff]
    %v59 = vld [vmem:[%s2 + $0x18] sm:$0xff]
    %v60 = vld [vmem:[%s3] sm:$0x1]
    %v62 = vperm.slane %v60, 0
    %vm64 = vcmask 261120
    %v66 = vsel %vm64, %v55, 0
    %68 = vmatpush.msra.mxu0 0.0
    %69 = vmatpush.msra.mxu0 0.0
    %70 = vmatpush.msra.mxu0 0.0
    %71 = vmatpush.msra.mxu0 0.0
    %72 = vmatpush.msra.mxu0 0.0
    %73 = vmatpush.msra.mxu0 0.0
    %74 = vmatpush.msra.mxu0 0.0
    %75 = vmatpush.msra.mxu0 0.0
    %76 = vmatpush.msra.mxu0 0.0
    %77 = vmatpush.msra.mxu0 0.0
    %78 = vmatpush.msra.mxu0 0.0
    %79 = vmatpush.msra.mxu0 0.0
    %80 = vmatpush.msra.mxu0 %v59
    %81 = vmatpush.msra.mxu0 %v58
    %82 = vmatpush.msra.mxu0 %v57
    %83 = vmatpush.msra.mxu0 %v56
    %84 = vmatmul.f32.gmra.mxu0 %v66
    %v85 = vpop.f32.mrf.mxu0
    %v86 = vadd.f32 %v62, %v85
    %87 = vdwg.mxu0
    %v88 = vtanh.pop %v86
    %v89 = vld [vmem:[%s4] sm:$0xff]
    %v90 = vld [vmem:[%s4 + $0x8] sm:$0xff]
    %v91 = vld [vmem:[%s4 + $0x10] sm:$0xff]
    %v92 = vld [vmem:[%s4 + $0x18] sm:$0xff]
    %v93 = vld [vmem:[%s5] sm:$0x1]
    %v95 = vperm.slane %v93, 0
    %v98 = vsel %vm64, %v88, 0
    %100 = vmatpush.msra.mxu0 0.0
    %101 = vmatpush.msra.mxu0 0.0
    %102 = vmatpush.msra.mxu0 0.0
    %103 = vmatpush.msra.mxu0 0.0
    %104 = vmatpush.msra.mxu0 0.0
    %105 = vmatpush.msra.mxu0 0.0
    %106 = vmatpush.msra.mxu0 0.0
    %107 = vmatpush.msra.mxu0 0.0
    %108 = vmatpush.msra.mxu0 0.0
    %109 = vmatpush.msra.mxu0 0.0
    %110 = vmatpush.msra.mxu0 0.0
    %111 = vmatpush.msra.mxu0 0.0
    %112 = vmatpush.msra.mxu0 %v92
    %113 = vmatpush.msra.mxu0 %v91
    %114 = vmatpush.msra.mxu0 %v90
    %115 = vmatpush.msra.mxu0 %v89
    %116 = vmatmul.f32.gmra.mxu0 %v98
    %v117 = vpop.f32.mrf.mxu0
    %v118 = vadd.f32 %v95, %v117
    %119 = vdwg.mxu0
    %vm120 = vcmask 130048
    %121 = vst.msk [vmem:[#allocation5] sm:$0xff] %vm120, %v118
    %v122 = vmul.f32 %v118, 0.5
    %v123 = vmul.f32 %v122, 1.442695
    %v124 = vpow.pop %v123
    %v125 = vld [vmem:[%s1] sm:$0xff]
    %v126 = vld [vmem:[%s1 + $0x8] sm:$0xff]
    %129 = vrot.lane.b32.xlu0 %v125, 8
    %v130 = vpop.permute.xlu0 %129
    %131 = vrot.lane.b32.xlu0 %v126, 8
    %v132 = vpop.permute.xlu0 %131
    %v135 = vmul.f32 %v124, %v130
    %v136 = vmul.f32 %v124, %v132
    %139 = vrot.lane.b32.xlu0 %v135, 120
    %v140 = vpop.permute.xlu0 %139
    %141 = vrot.lane.b32.xlu0 %v136, 120
    %v142 = vpop.permute.xlu0 %141
    %v145 = vadd.f32 %v118, %v140
    %v146 = vadd.f32 %v118, %v142
    %v147 = vld [vmem:[%s6] sm:$0xff]
    %v148 = vld [vmem:[%s7] sm:$0x1]
    %v150 = vperm.slane %v148, 0
    %vm152 = vcmask 64512
    %v154 = vsel %vm152, %v145, 0
    %v157 = vsel %vm152, %v146, 0
    %159 = vmatpush.msra.mxu0 0.0
    %160 = vmatpush.msra.mxu0 0.0
    %161 = vmatpush.msra.mxu0 0.0
    %162 = vmatpush.msra.mxu0 0.0
    %163 = vmatpush.msra.mxu0 0.0
    %164 = vmatpush.msra.mxu0 0.0
    %165 = vmatpush.msra.mxu0 0.0
    %166 = vmatpush.msra.mxu0 0.0
    %167 = vmatpush.msra.mxu0 0.0
    %168 = vmatpush.msra.mxu0 0.0
    %169 = vmatpush.msra.mxu0 0.0
    %170 = vmatpush.msra.mxu0 0.0
    %171 = vmatpush.msra.mxu0 0.0
    %172 = vmatpush.msra.mxu0 0.0
    %173 = vmatpush.msra.mxu0 0.0
    %174 = vmatpush.msra.mxu0 %v147
    %175 = vmatmul.f32.gmra.mxu0 %v154
    %v176 = vpop.f32.mrf.mxu0
    %v177 = vadd.f32 %v150, %v176
    %178 = vmatmul.f32.gmra.mxu0 %v157
    %v179 = vpop.f32.mrf.mxu0
    %v180 = vadd.f32 %v150, %v179
    %181 = vdwg.mxu0
    %v182 = vtanh.pop %v177
    %v183 = vtanh.pop %v180
    %v184 = vld [vmem:[#allocation2] sm:$0xff]
    %v185 = vld [vmem:[#allocation2 + $0x8] sm:$0xff]
    %v186 = vld [vmem:[#allocation2 + $0x10] sm:$0xff]
    %v187 = vld [vmem:[#allocation2 + $0x18] sm:$0xff]
    %v188 = vld [vmem:[%s9] sm:$0x1]
    %v190 = vperm.slane %v188, 0
    %v193 = vsel %vm64, %v182, 0
    %v196 = vsel %vm64, %v183, 0
    %198 = vmatpush.msra.mxu0 0.0
    %199 = vmatpush.msra.mxu0 0.0
    %200 = vmatpush.msra.mxu0 0.0
    %201 = vmatpush.msra.mxu0 0.0
    %202 = vmatpush.msra.mxu0 0.0
    %203 = vmatpush.msra.mxu0 0.0
    %204 = vmatpush.msra.mxu0 0.0
    %205 = vmatpush.msra.mxu0 0.0
    %206 = vmatpush.msra.mxu0 0.0
    %207 = vmatpush.msra.mxu0 0.0
    %208 = vmatpush.msra.mxu0 0.0
    %209 = vmatpush.msra.mxu0 0.0
    %210 = vmatpush.msra.mxu0 %v187
    %211 = vmatpush.msra.mxu0 %v186
    %212 = vmatpush.msra.mxu0 %v185
    %213 = vmatpush.msra.mxu0 %v184
    %214 = vmatmul.f32.gmra.mxu0 %v193
    %v215 = vpop.f32.mrf.mxu0
    %v216 = vadd.f32 %v190, %v215
    %217 = vmatmul.f32.gmra.mxu0 %v196
    %v218 = vpop.f32.mrf.mxu0
    %v219 = vadd.f32 %v190, %v218
    %220 = vdwg.mxu0
    %vm221 = vcmask 523264
    %222 = vst.msk [vmem:[#allocation6] sm:$0xff] %vm221, %v216
    %223 = vst.msk [vmem:[#allocation6 + $0x8] sm:$0xff] %vm221, %v219
    // Predicated region
    $region46: #{tpu_custom_call.1} parent=1 // pred_check
      _
    $region47: #{tpu_custom_call.1} parent=1 // pred_check_branch
      %225 = sbr.rel (0) target = $region49
    $region48: #{tpu_custom_call.1} parent=1 // pred_region
      %227 = vsyncadd [#allocation4], 0
      %s229 = sshll.u32 [#allocation5], 4
      %s230 = int_to_ptr.vmem [resolvable:$true] %s229
      %s231 = sshll.u32 %s10, 4
      %s232 = int_to_ptr.hbm [resolvable:$true] %s231
      %234 = dma.vmem_to_hbm [thread:$0]  %s230, 128, %s232, [#allocation4]
    $region49: #{tpu_custom_call.1} parent=1 // pred_fallthru
      _
    // Predicated region
    $region50: #{tpu_custom_call.1} parent=1 // pred_check
      _
    $region51: #{tpu_custom_call.1} parent=1 // pred_check_branch
      %236 = sbr.rel (0) target = $region53
    $region52: #{tpu_custom_call.1} parent=1 // pred_region
      %238 = vsyncadd [#allocation7], 0
      %s239 = sshll.u32 [#allocation6], 4
      %s240 = int_to_ptr.vmem [resolvable:$true] %s239
      %s241 = sshll.u32 %s11, 4
      %s242 = int_to_ptr.hbm [resolvable:$true] %s241
      %247 = dma.vmem_to_hbm [thread:$0]  %s240, 256, %s242, [#allocation7], 128, 128, 8
    $region53: #{tpu_custom_call.1} parent=1 // pred_fallthru
      _
    // Predicated region
    $region54: #{tpu_custom_call.1} parent=1 // pred_check
      _
    $region55: #{tpu_custom_call.1} parent=1 // pred_check_branch
      %249 = sbr.rel (0) target = $region57
    $region56: #{tpu_custom_call.1} parent=1 // pred_region
      %251 = dma.done [#allocation4], 128
    $region57: #{tpu_custom_call.1} parent=1 // pred_fallthru
      _
    // Predicated region
    $region58: #{tpu_custom_call.1} parent=1 // pred_check
      _
    $region59: #{tpu_custom_call.1} parent=1 // pred_check_branch
      %253 = sbr.rel (0) target = $region61
    $region60: #{tpu_custom_call.1} parent=1 // pred_region
      %255 = dma.done [#allocation7], 256
    $region61: #{tpu_custom_call.1} parent=1 // pred_fallthru
      _
    %256 = vsyncpa [#allocation3], 1
    %257 = vsyncpa [#allocation4], 1
    %258 = vsyncpa [#allocation7], 1

</llo_original>
